<compile_context>
chip_gen: v7x
topology: tpu7x:2x2x1
jax: 0.10.0
libtpu: 0.0.40
codegen_flags: <defaults>
</compile_context>

<pallas_src>
import numpy as np
import jax
import jax.numpy as jnp
from jax import lax
from jax.experimental import pallas as pl
from jax.experimental.pallas import tpu as pltpu


# ----------------------------------------------------------------------------
# Parameter construction (deterministic, mirrors Embeding.__init__)
# ----------------------------------------------------------------------------
def get_sinusoid_encoding_table(n_seq, d_hidn):
    def cal_angle(position, i_hidn):
        return position / np.power(10000, 2 * (i_hidn // 2) / d_hidn)

    def get_posi_angle_vec(position):
        return [cal_angle(position, i_hidn) for i_hidn in range(d_hidn)]

    tbl = np.array([get_posi_angle_vec(i) for i in range(n_seq)], dtype=np.float64)
    tbl[:, 0::2] = np.sin(tbl[:, 0::2])
    tbl[:, 1::2] = np.cos(tbl[:, 1::2])
    return tbl.astype(np.float32)


def _round_up(x, m):
    return (x + m - 1) // m * m


# ----------------------------------------------------------------------------
# Pallas kernel
# ----------------------------------------------------------------------------
def make_embed_kernel(i_pad, n_tok_cols):
    """n_tok_cols = V: position columns live at [V, V+P) of the combined table."""

    def embed_kernel(ids_ref, pos_ref, tbl_ref, out_ref):
        ids = ids_ref[...]                      # (TM, 1) int32 token ids
        pos = pos_ref[...]                      # (TM, 1) int32 positions (arange+1)
        pos = jnp.where(ids == i_pad, 0, pos)   # pad tokens -> position 0 (VPU)

        tm = ids.shape[0]
        wp = tbl_ref.shape[0]                   # padded V + P (multiple of 128)

        # Combined one-hot: token column OR (V + position) column.  Exactly
        # two hot lanes per row, so one MXU matmul yields tok_emb + pos_emb.
        col = lax.broadcasted_iota(jnp.int32, (tm, wp), 1)
        onehot = jnp.logical_or(col == ids, col == pos + n_tok_cols)
        onehot = onehot.astype(jnp.float32)     # (TM, Wp)

        out_ref[...] = jnp.dot(onehot, tbl_ref[...],
                               preferred_element_type=jnp.float32)  # (TM, Dp)

    return embed_kernel


# ----------------------------------------------------------------------------
# Wrapper
# ----------------------------------------------------------------------------
def embeding_forward(inputs, emb_weight, pos_table, i_pad, *, row_tile=256):
    """inputs: (B, S) int32; emb_weight: (n_vocab, d_hidn); pos_table: (pos_seq+1, d_hidn)."""
    B, S = inputs.shape
    V, D = emb_weight.shape
    P = pos_table.shape[0]
    T = B * S

    TM = max(8, (int(row_tile) // 8) * 8)       # row tile (multiple of 8 sublanes)
    Tp = _round_up(T, TM)                       # padded token count
    Dp = _round_up(D, 128)                      # lane-dense output width
    Wp = _round_up(V + P, 128)                  # lane/contraction-aligned table rows

    # Flattened, padded lane/sublane-friendly operands.
    ids_flat = inputs.reshape(T).astype(jnp.int32)
    pos_flat = jnp.broadcast_to(jnp.arange(1, S + 1, dtype=jnp.int32), (B, S)).reshape(T)
    ids_col = jnp.pad(ids_flat, (0, Tp - T), constant_values=i_pad).reshape(Tp, 1)
    pos_col = jnp.pad(pos_flat, (0, Tp - T), constant_values=0).reshape(Tp, 1)

    # Combined [token ; position] table, zero padded to (Wp, Dp).
    table = jnp.zeros((Wp, Dp), dtype=jnp.float32)
    table = table.at[:V, :D].set(emb_weight.astype(jnp.float32))
    table = table.at[V:V + P, :D].set(pos_table.astype(jnp.float32))

    grid = (Tp // TM,)
    cost = pl.CostEstimate(
        flops=2 * Tp * Wp * Dp,
        transcendentals=0,
        bytes_accessed=2 * Tp * 4 + Wp * Dp * 4 + Tp * Dp * 4,
    )

    out = pl.pallas_call(
        make_embed_kernel(i_pad, V),
        out_shape=jax.ShapeDtypeStruct((Tp, Dp), jnp.float32),
        grid=grid,
        in_specs=[
            pl.BlockSpec((TM, 1), lambda i: (i, 0)),     # token ids (row tile)
            pl.BlockSpec((TM, 1), lambda i: (i, 0)),     # base positions (row tile)
            pl.BlockSpec((Wp, Dp), lambda i: (0, 0)),    # combined table, VMEM-resident
        ],
        out_specs=pl.BlockSpec((TM, Dp), lambda i: (i, 0)),
        compiler_params=pltpu.CompilerParams(
            dimension_semantics=("parallel",),           # megacore split on v7x
            vmem_limit_bytes=32 * 1024 * 1024,
        ),
        cost_estimate=cost,
    )(ids_col, pos_col, table)

    # Un-pad and reshape in the wrapper (free metadata, keeps the kernel 2-D).
    return out[:T, :D].reshape(B, S, D)


# ----------------------------------------------------------------------------
# Demo / correctness check
# ----------------------------------------------------------------------------
if __name__ == "__main__":
    # Small config consistent with the module's forward.
    n_vocab = 16
    d_hidn = 32
    pos_seq = 8          # sinusoid table has pos_seq + 1 rows
    i_pad = 0
    B, S = 2, 8

    key = jax.random.PRNGKey(0)
    k_emb, k_ids = jax.random.split(key)

    # nn.Embedding default init ~ N(0, 1); deterministic here.
    emb_weight = jax.random.normal(k_emb, (n_vocab, d_hidn), dtype=jnp.float32)
    pos_table = jnp.asarray(get_sinusoid_encoding_table(pos_seq + 1, d_hidn))

    # Token ids with a couple of pad tokens to exercise the masking path.
    inputs = jax.random.randint(k_ids, (B, S), 0, n_vocab, dtype=jnp.int32)
    inputs = inputs.at[0, 6:].set(i_pad).at[1, 3:].set(i_pad)

    # Small row tile so the demo actually exercises the grid (2 steps).
    out = embeding_forward(inputs, emb_weight, pos_table, i_pad, row_tile=8)
    out = jax.block_until_ready(out)

    # Pure-JAX reference of the PyTorch forward.
    positions = jnp.broadcast_to(jnp.arange(S, dtype=jnp.int32) + 1, (B, S))
    positions = jnp.where(inputs == i_pad, 0, positions)
    ref = emb_weight[inputs] + pos_table[positions]

    np.testing.assert_allclose(np.asarray(out), np.asarray(ref), rtol=1e-5, atol=1e-5)
    print("KERNEL_OK")
</pallas_src>

<mosaic_0001>
module attributes {stable_mosaic.version = 11 : i64} {
  func.func @embed_kernel(%arg0: i32, %arg1: memref<8x1xi32, #tpu.memory_space<vmem>>, %arg2: memref<8x1xi32, #tpu.memory_space<vmem>>, %arg3: memref<128x128xf32, #tpu.memory_space<vmem>>, %arg4: memref<8x128xf32, #tpu.memory_space<vmem>>) attributes {dimension_semantics = [#tpu.dimension_semantics<parallel>], iteration_bounds = array<i64: 2>, scalar_prefetch = 0 : i64, scratch_operands = 0 : i64, tpu.core_type = #tpu.core_type<tc>, window_params = [{transform_indices = @transform_0, window_bounds = array<i64: 8, 1>}, {transform_indices = @transform_1, window_bounds = array<i64: 8, 1>}, {pipeline_mode = #tpu.pipeline_mode<synchronous>, transform_indices = @transform_2, window_bounds = array<i64: 128, 128>}, {transform_indices = @transform_3, window_bounds = array<i64: 8, 128>}]} {
    %c0 = arith.constant 0 : index
    %c0_0 = arith.constant 0 : index
    %0 = vector.load %arg1[%c0, %c0_0] : memref<8x1xi32, #tpu.memory_space<vmem>>, vector<8x1xi32>
    %c0_1 = arith.constant 0 : index
    %c0_2 = arith.constant 0 : index
    %1 = vector.load %arg2[%c0_1, %c0_2] : memref<8x1xi32, #tpu.memory_space<vmem>>, vector<8x1xi32>
    %c0_i32 = arith.constant 0 : i32
    %2 = vector.broadcast %c0_i32 : i32 to vector<8x1xi32>
    %3 = arith.cmpi eq, %0, %2 : vector<8x1xi32>
    %c0_i32_3 = arith.constant 0 : i32
    %4 = vector.broadcast %c0_i32_3 : i32 to vector<8x1xi32>
    %5 = arith.select %3, %4, %1 : vector<8x1xi1>, vector<8x1xi32>
    %6 = tpu.iota {dimensions = array<i32: 1>} : vector<8x128xi32>
    %7 = vector.broadcast %0 : vector<8x1xi32> to vector<8x128xi32>
    %8 = arith.cmpi eq, %6, %7 : vector<8x128xi32>
    %c16_i32 = arith.constant 16 : i32
    %9 = vector.broadcast %c16_i32 : i32 to vector<8x1xi32>
    %10 = arith.addi %5, %9 : vector<8x1xi32>
    %11 = vector.broadcast %10 : vector<8x1xi32> to vector<8x128xi32>
    %12 = arith.cmpi eq, %6, %11 : vector<8x128xi32>
    %13 = arith.ori %8, %12 : vector<8x128xi1>
    %14 = arith.extui %13 : vector<8x128xi1> to vector<8x128xi32>
    %15 = arith.sitofp %14 : vector<8x128xi32> to vector<8x128xf32>
    %c0_4 = arith.constant 0 : index
    %c0_5 = arith.constant 0 : index
    %16 = vector.load %arg3[%c0_4, %c0_5] : memref<128x128xf32, #tpu.memory_space<vmem>>, vector<128x128xf32>
    %cst = arith.constant dense<0.000000e+00> : vector<8x128xf32>
    %17 = tpu.matmul %15, %16, %cst {dimension_numbers = #tpu.dot_dimension_numbers<[1], [0], [0], [1], [0, 0, 1, 1], [], []>} : vector<8x128xf32>, vector<128x128xf32>, vector<8x128xf32> -> vector<8x128xf32>
    %c0_6 = arith.constant 0 : index
    %c0_7 = arith.constant 0 : index
    %18 = vector.load %arg4[%c0_6, %c0_7] : memref<8x128xf32, #tpu.memory_space<vmem>>, vector<8x128xf32>
    tpu.vector_store %arg4[%c0_6, %c0_7], %17 {strides = array<i32>} : memref<8x128xf32, #tpu.memory_space<vmem>>, vector<8x128xf32>,
    return
  }
  func.func @transform_0(%arg0: i32) -> (i32, i32) {
    %c0_i32 = arith.constant 0 : i32
    %c0_i32_0 = arith.constant 0 : i32
    return %arg0, %c0_i32 : i32, i32
  }
  func.func @transform_1(%arg0: i32) -> (i32, i32) {
    %c0_i32 = arith.constant 0 : i32
    %c0_i32_0 = arith.constant 0 : i32
    return %arg0, %c0_i32 : i32, i32
  }
  func.func @transform_2(%arg0: i32) -> (i32, i32) {
    %c0_i32 = arith.constant 0 : i32
    %c0_i32_0 = arith.constant 0 : i32
    %c0_i32_1 = arith.constant 0 : i32
    return %c0_i32, %c0_i32_0 : i32, i32
  }
  func.func @transform_3(%arg0: i32) -> (i32, i32) {
    %c0_i32 = arith.constant 0 : i32
    %c0_i32_0 = arith.constant 0 : i32
    return %arg0, %c0_i32 : i32, i32
  }
}

</mosaic_0001>

<llo_original>
// kernel: tpu_custom_call.1
$region0: #{tpu_custom_call.1}
  #allocation0 [shape = 'u32[]', space=smem, size = 0x4, offset = 0x4, fixed_abs, tag = 'smem constant byte address 0x4 - core index']
  #allocation1 [shape = 'u32[144,128]{1,0:T(1,128)}', space=vmem, size = 0x12000, scoped, tag = 'internal scratch']
  %s0 = inlined_call_operand.vmem [shape: s32[16,1], index: 0, kind: input, shape index: {}]
  %s1 = inlined_call_operand.vmem [shape: s32[16,1], index: 1, kind: input, shape index: {}]
  %s2 = inlined_call_operand.hbm [shape: f32[128,128], index: 2, kind: input, shape index: {}]
  %s3 = inlined_call_operand.hbm [shape: f32[16,128], index: 3, kind: output, shape index: {}]
  %s4 = sld [smem:[#allocation0]]
  $region49: #{tpu_custom_call.1} parent=0
    _
  %s6 = ssub.s32 1, %s4
  %s7 = scalar_select 0, %s6, %s4
  $region1: #{tpu_custom_call.1} parent=0
    #allocation2 [shape = 'u8[65536]{0}', space=vmem, size = 0x10000, scoped, tag = 'input window, operand 2, single buffered']
    #allocation3 [shape = 's32[2]{0}', space=sflag, size = 0x8, scoped, tag = 'scoped memory for tpu_custom_call.1']
    #allocation4 [shape = 's32[2]{0}', space=sflag, size = 0x8, scoped, tag = 'scoped memory for tpu_custom_call.1']
    #allocation5 [shape = 'u8[8192]{0}', space=vmem, size = 0x2000, scoped, tag = 'output window, operand 0']
    %8 = vsyncpa [#allocation3], 0
    %9 = vsyncpa [#allocation4], 0
    %s10 = scalar_lea.sflag [#allocation4], 1
    %11 = vsyncpa %s10, 0
    loop: start=0, step=1, limit=4
    $region2: #{tpu_custom_call.1} parent=1 // loop_pre_header
      _
    $region3: #{tpu_custom_call.1} parent=1 // loop_header
      %s13 = sphi 0, %s17
      %p14 = scmp.ge.s32.totalorder %s13, 4
      %s23 = sphi 0, %s25
      %s26 = sphi 0, %s23
      %s27 = sphi 0, %s26
      %s43 = sphi 0, %s27
      %s49 = sphi 0, %s51
      %s52 = sphi 0, %s49
      %s53 = sphi 0, %s52
      %s69 = sphi 0, %s53
      %s73 = sphi 0, %s73
      %s75 = sphi 0, %s73
      %s76 = sphi 0, %s75
      %s90 = sphi 0, %s76
      %s96 = sphi 0, %s98
      %s99 = sphi 0, %s96
      %s100 = sphi 0, %s99
      %s116 = sphi 0, %s100
    $region4: #{tpu_custom_call.1} parent=1 // loop_header_branch
      %16 = sbr.rel (%p14) target = $region8
    $region5: #{tpu_custom_call.1} parent=1 // loop_body
      %s18 = ssub.s32 %s13, 1
      %s19 = ssub.s32 %s13, 2
      %s20 = sadd.s32 %s13, 1
      %s21 = ssub.s32 %s13, %s20
      %p22 = scmp.eq.s32.totalorder %s21, 0
      %s24 = sadd.s32 %s23, 1
      %s25 = scalar_select %p22, %s23, %s24
      %p28 = pneg %p22
      %p29 = scmp.eq.s32.totalorder %s13, 1
      %p30 = por %p28, %p29
      %p31 = scmp.ne.s32.totalorder %s23, %s26
      %p32 = scmp.eq.s32.totalorder %s13, 0
      %p33 = por %p31, %p32
      %p34 = scmp.ne.s32.totalorder %s23, %s26
      %p35 = scmp.eq.s32.totalorder %s18, 1
      %p36 = por %p34, %p35
      %p37 = scmp.ne.s32.totalorder %s26, %s27
      %p38 = scmp.eq.s32.totalorder %s18, 0
      %p39 = por %p37, %p38
      %p40 = scmp.ne.s32.totalorder %s26, %s27
      %p41 = scmp.eq.s32.totalorder %s19, 1
      %p42 = por %p40, %p41
      %p44 = scmp.ne.s32.totalorder %s27, %s43
      %p45 = scmp.eq.s32.totalorder %s19, 0
      %p46 = por %p44, %p45
      %s47 = ssub.s32 %s13, %s20
      %p48 = scmp.eq.s32.totalorder %s47, 0
      %s50 = sadd.s32 %s49, 1
      %s51 = scalar_select %p48, %s49, %s50
      %p54 = pneg %p48
      %p55 = scmp.eq.s32.totalorder %s13, 1
      %p56 = por %p54, %p55
      %p57 = scmp.ne.s32.totalorder %s49, %s52
      %p58 = scmp.eq.s32.totalorder %s13, 0
      %p59 = por %p57, %p58
      %p60 = scmp.ne.s32.totalorder %s49, %s52
      %p61 = scmp.eq.s32.totalorder %s18, 1
      %p62 = por %p60, %p61
      %p63 = scmp.ne.s32.totalorder %s52, %s53
      %p64 = scmp.eq.s32.totalorder %s18, 0
      %p65 = por %p63, %p64
      %p66 = scmp.ne.s32.totalorder %s52, %s53
      %p67 = scmp.eq.s32.totalorder %s19, 1
      %p68 = por %p66, %p67
      %p70 = scmp.ne.s32.totalorder %s53, %s69
      %p71 = scmp.eq.s32.totalorder %s19, 0
      %p72 = por %p70, %p71
      %s74 = sadd.s32 %s73, 1
      %p77 = scmp.eq.s32.totalorder %s13, 1
      %p78 = scmp.ne.s32.totalorder %s73, %s75
      %p79 = scmp.eq.s32.totalorder %s13, 0
      %p80 = por %p78, %p79
      %p81 = scmp.ne.s32.totalorder %s73, %s75
      %p82 = scmp.eq.s32.totalorder %s18, 1
      %p83 = por %p81, %p82
      %p84 = scmp.ne.s32.totalorder %s75, %s76
      %p85 = scmp.eq.s32.totalorder %s18, 0
      %p86 = por %p84, %p85
      %p87 = scmp.ne.s32.totalorder %s75, %s76
      %p88 = scmp.eq.s32.totalorder %s19, 1
      %p89 = por %p87, %p88
      %p91 = scmp.ne.s32.totalorder %s76, %s90
      %p92 = scmp.eq.s32.totalorder %s19, 0
      %p93 = por %p91, %p92
      %s94 = ssub.s32 %s13, %s20
      %p95 = scmp.eq.s32.totalorder %s94, 0
      %s97 = sadd.s32 %s96, 1
      %s98 = scalar_select %p95, %s96, %s97
      %p101 = pneg %p95
      %p102 = scmp.eq.s32.totalorder %s13, 1
      %p103 = por %p101, %p102
      %p104 = scmp.ne.s32.totalorder %s96, %s99
      %p105 = scmp.eq.s32.totalorder %s13, 0
      %p106 = por %p104, %p105
      %p107 = scmp.ne.s32.totalorder %s96, %s99
      %p108 = scmp.eq.s32.totalorder %s18, 1
      %p109 = por %p107, %p108
      %p110 = scmp.ne.s32.totalorder %s99, %s100
      %p111 = scmp.eq.s32.totalorder %s18, 0
      %p112 = por %p110, %p111
      %p113 = scmp.ne.s32.totalorder %s99, %s100
      %p114 = scmp.eq.s32.totalorder %s19, 1
      %p115 = por %p113, %p114
      %p117 = scmp.ne.s32.totalorder %s100, %s116
      %p118 = scmp.eq.s32.totalorder %s19, 0
      %p119 = por %p117, %p118
      %p120 = scmp.le.s32.totalorder 1, %s13
      %p121 = scmp.lt.s32.totalorder %s13, 3
      %p122 = pnand %p120, %p121
      %p123 = pneg %p122
      // Predicated region
      $region9: #{tpu_custom_call.1} parent=5 // pred_check
        _
      $region10: #{tpu_custom_call.1} parent=5 // pred_check_branch
        %125 = sbr.rel (%p122) target = $region12
      $region11: #{tpu_custom_call.1} parent=5 // pred_region
        %s126 = ssub.s32 %s13, 1
        // Predicated region
        $region13: #{tpu_custom_call.1} parent=11 // pred_check
          %p127 = pneg %p86
        $region14: #{tpu_custom_call.1} parent=11 // pred_check_branch
          %129 = sbr.rel (%p127) target = $region16
        $region15: #{tpu_custom_call.1} parent=11 // pred_region
          %s131 = ssub.s32 2048, 2048
          %132 = vsyncadd [#allocation3], %s131
          %s133 = sshll.u32 [#allocation2], 4
          %s134 = int_to_ptr.vmem [resolvable:$true] %s133
          %139 = dma.hbm_to_vmem [thread:$0]  %s2, 2048, %s134, [#allocation3], 128, 128, 8
        $region16: #{tpu_custom_call.1} parent=11 // pred_fallthru
          _
      $region12: #{tpu_custom_call.1} parent=5 // pred_fallthru
        _
      %p140 = scmp.lt.s32.totalorder %s13, 2
      // Predicated region
      $region17: #{tpu_custom_call.1} parent=5 // pred_check
        %p141 = pneg %p140
      $region18: #{tpu_custom_call.1} parent=5 // pred_check_branch
        %143 = sbr.rel (%p141) target = $region20
      $region19: #{tpu_custom_call.1} parent=5 // pred_region
        // Predicated region
        $region21: #{tpu_custom_call.1} parent=19 // pred_check
          %p144 = pneg %p33
        $region22: #{tpu_custom_call.1} parent=19 // pred_check_branch
          %146 = sbr.rel (%p144) target = $region24
        $region23: #{tpu_custom_call.1} parent=19 // pred_region
          %p147 = scmp.lt.s32.totalorder %s13, 1
          %s148 = scalar_select %p147, %s13, 1
          %s149 = smul.addr %s148, 8
          %s150 = scalar_lea.vmem %s0, %s149
        $region24: #{tpu_custom_call.1} parent=19 // pred_fallthru
          _
        // Predicated region
        $region25: #{tpu_custom_call.1} parent=19 // pred_check
          %p151 = pneg %p59
        $region26: #{tpu_custom_call.1} parent=19 // pred_check_branch
          %153 = sbr.rel (%p151) target = $region28
        $region27: #{tpu_custom_call.1} parent=19 // pred_region
          %p154 = scmp.lt.s32.totalorder %s13, 1
          %s155 = scalar_select %p154, %s13, 1
          %s156 = smul.addr %s155, 8
          %s157 = scalar_lea.vmem %s1, %s156
        $region28: #{tpu_custom_call.1} parent=19 // pred_fallthru
          _
      $region20: #{tpu_custom_call.1} parent=5 // pred_fallthru
        _
      %p158 = scmp.le.s32.totalorder 1, %s13
      %p159 = scmp.lt.s32.totalorder %s13, 3
      %p160 = pnand %p158, %p159
      %p161 = pneg %p160
      // Predicated region
      $region29: #{tpu_custom_call.1} parent=5 // pred_check
        _
      $region30: #{tpu_custom_call.1} parent=5 // pred_check_branch
        %163 = sbr.rel (%p160) target = $region32
      $region31: #{tpu_custom_call.1} parent=5 // pred_region
        %s164 = ssub.s32 %s13, 1
        // Predicated region
        $region33: #{tpu_custom_call.1} parent=31 // pred_check
          %p165 = pneg %p86
        $region34: #{tpu_custom_call.1} parent=31 // pred_check_branch
          %167 = sbr.rel (%p165) target = $region36
        $region35: #{tpu_custom_call.1} parent=31 // pred_region
          %168 = dma.done [#allocation3], 2048
        $region36: #{tpu_custom_call.1} parent=31 // pred_fallthru
          _
        %p169 = scmp.lt.s32.totalorder %s18, 1
        %s170 = scalar_select %p169, %s18, 1
        %s171 = smul.addr %s170, 8
        %s172 = scalar_lea.vmem %s0, %s171
        %p173 = pneg %p39
        %p174 = pneg %p36
        %p175 = scmp.lt.s32.totalorder %s18, 1
        %s176 = scalar_select %p175, %s18, 1
        %s177 = smul.addr %s176, 8
        %s178 = scalar_lea.vmem %s1, %s177
        %p179 = pneg %p65
        %p180 = pneg %p62
        %p181 = pneg %p86
        %p182 = pneg %p83
        %p183 = pneg %p112
        %p184 = pneg %p109
        %s185 = sand.u32 %s99, 1
        %s186 = scalar_lea.sflag [#allocation4], %s185
        %s187 = sand.u32 %s99, 1
        %s188 = smul.addr %s187, 8
        %s189 = scalar_lea.vmem [#allocation5], %s188
        %p190 = scmp.lt.s32.totalorder %s18, 1
        %s191 = scalar_select %p190, %s18, 1
        %s192 = smul.addr %s191, 8
        %s193 = scalar_lea.vmem %s0, %s192
        %p194 = scmp.lt.s32.totalorder %s18, 1
        %s195 = scalar_select %p194, %s18, 1
        %s196 = smul.addr %s195, 8
        %s197 = scalar_lea.vmem %s1, %s196
        %v198 = vld [vmem:[%s193] sm:$0xff]
        %v199 = vld [vmem:[%s197] sm:$0xff]
        %vm200 = vcmp.eq.s32.totalorder %v198, 0
        %v201 = vsel %vm200, 0, %v199
        %v202 = vlaneseq
        %v203 = vand.u32 %v202, 127
        %204 = vset.pattern.permute.xlu0 0
        %205 = vperm.xlu0 %204, %v198
        %v206 = vpop.permute.xlu0 %205
        %vm207 = vcmp.eq.s32.totalorder %v203, %v206
        %v208 = vadd.s32 %v201, 16
        %209 = vset.pattern.permute.xlu0 0
        %210 = vperm.xlu0 %209, %v208
        %v211 = vpop.permute.xlu0 %210
        %vm212 = vcmp.eq.s32.totalorder %v203, %v211
        %vm213 = vmor %vm207, %vm212
        %v214 = vsel %vm213, 1, 0
        %v215 = vcvt.s32.f32 %v214
        %v216 = vld [vmem:[#allocation2] sm:$0xff]
        %v217 = vld [vmem:[#allocation2 + $0x8] sm:$0xff]
        %v218 = vld [vmem:[#allocation2 + $0x10] sm:$0xff]
        %v219 = vld [vmem:[#allocation2 + $0x18] sm:$0xff]
        %v220 = vld [vmem:[#allocation2 + $0x20] sm:$0xff]
        %v221 = vld [vmem:[#allocation2 + $0x28] sm:$0xff]
        %v222 = vld [vmem:[#allocation2 + $0x30] sm:$0xff]
        %v223 = vld [vmem:[#allocation2 + $0x38] sm:$0xff]
        %v224 = vld [vmem:[#allocation2 + $0x40] sm:$0xff]
        %v225 = vld [vmem:[#allocation2 + $0x48] sm:$0xff]
        %v226 = vld [vmem:[#allocation2 + $0x50] sm:$0xff]
        %v227 = vld [vmem:[#allocation2 + $0x58] sm:$0xff]
        %v228 = vld [vmem:[#allocation2 + $0x60] sm:$0xff]
        %v229 = vld [vmem:[#allocation2 + $0x68] sm:$0xff]
        %v230 = vld [vmem:[#allocation2 + $0x70] sm:$0xff]
        %v231 = vld [vmem:[#allocation2 + $0x78] sm:$0xff]
        %232 = vmatprep.subr.mxu0 0.0
        %233 = vmatpush1.msra.mxu0 %v216
        %234 = vmatprep.subr.mxu0 0.0
        %235 = vmatpush1.msra.mxu0 %v217
        %236 = vmatprep.subr.mxu0 0.0
        %237 = vmatpush1.msra.mxu0 %v218
        %238 = vmatprep.subr.mxu0 0.0
        %239 = vmatpush1.msra.mxu0 %v219
        %240 = vmatprep.subr.mxu0 0.0
        %241 = vmatpush1.msra.mxu0 %v220
        %242 = vmatprep.subr.mxu0 0.0
        %243 = vmatpush1.msra.mxu0 %v221
        %244 = vmatprep.subr.mxu0 0.0
        %245 = vmatpush1.msra.mxu0 %v222
        %246 = vmatprep.subr.mxu0 0.0
        %247 = vmatpush1.msra.mxu0 %v223
        %248 = vmatprep.subr.mxu0 0.0
        %249 = vmatpush1.msra.mxu0 %v224
        %250 = vmatprep.subr.mxu0 0.0
        %251 = vmatpush1.msra.mxu0 %v225
        %252 = vmatprep.subr.mxu0 0.0
        %253 = vmatpush1.msra.mxu0 %v226
        %254 = vmatprep.subr.mxu0 0.0
        %255 = vmatpush1.msra.mxu0 %v227
        %256 = vmatprep.subr.mxu0 0.0
        %257 = vmatpush1.msra.mxu0 %v228
        %258 = vmatprep.subr.mxu0 0.0
        %259 = vmatpush1.msra.mxu0 %v229
        %260 = vmatprep.subr.mxu0 0.0
        %261 = vmatpush1.msra.mxu0 %v230
        %262 = vmatprep.subr.mxu0 0.0
        %263 = vmatpush1.msra.mxu0 %v231
        %264 = vmatprep.subr.mxu0 0.0
        %265 = vmatpush1.msra.mxu0 0.0
        %266 = vmatprep.subr.mxu0 0.0
        %267 = vmatpush1.msra.mxu0 0.0
        %268 = vmatprep.subr.mxu0 0.0
        %269 = vmatpush1.msra.mxu0 0.0
        %270 = vmatprep.subr.mxu0 0.0
        %271 = vmatpush1.msra.mxu0 0.0
        %272 = vmatprep.subr.mxu0 0.0
        %273 = vmatpush1.msra.mxu0 0.0
        %274 = vmatprep.subr.mxu0 0.0
        %275 = vmatpush1.msra.mxu0 0.0
        %276 = vmatprep.subr.mxu0 0.0
        %277 = vmatpush1.msra.mxu0 0.0
        %278 = vmatprep.subr.mxu0 0.0
        %279 = vmatpush1.msra.mxu0 0.0
        %280 = vmatprep.subr.mxu0 0.0
        %281 = vmatpush1.msra.mxu0 0.0
        %282 = vmatprep.subr.mxu0 0.0
        %283 = vmatpush1.msra.mxu0 0.0
        %284 = vmatprep.subr.mxu0 0.0
        %285 = vmatpush1.msra.mxu0 0.0
        %286 = vmatprep.subr.mxu0 0.0
        %287 = vmatpush1.msra.mxu0 0.0
        %288 = vmatprep.subr.mxu0 0.0
        %289 = vmatpush1.msra.mxu0 0.0
        %290 = vmatprep.subr.mxu0 0.0
        %291 = vmatpush1.msra.mxu0 0.0
        %292 = vmatprep.subr.mxu0 0.0
        %293 = vmatpush1.msra.mxu0 0.0
        %294 = vmatprep.subr.mxu0 0.0
        %295 = vmatpush1.msra.mxu0 0.0
        %296 = vmatprep.mubr.f32.mxu0 0.0
        %297 = vmatmul.mubr.f32.gmra.mrb[0].mxu0 %v215
        %v298 = vpop.f32.mrb[0].mxu0
        %v299 = vadd.f32 0.0, %v298
        %v300 = vpop.f32.mrb[0].mxu0
        %301 = vdwg.mxu0
        %302 = vst [vmem:[%s189] sm:$0xff] %v299
        %s303 = sand.u32 %s99, 1
        %s304 = scalar_lea.sflag [#allocation4], %s303
        %s305 = sand.u32 %s99, 1
        %s306 = smul.addr %s305, 8
        %s307 = scalar_lea.vmem [#allocation5], %s306
        // Predicated region
        $region37: #{tpu_custom_call.1} parent=31 // pred_check
          %p308 = pneg %p109
        $region38: #{tpu_custom_call.1} parent=31 // pred_check_branch
          %310 = sbr.rel (%p308) target = $region40
        $region39: #{tpu_custom_call.1} parent=31 // pred_region
          %s312 = ssub.s32 128, 128
          %313 = vsyncadd %s304, %s312
          %s314 = smul.addr %s18, 128
          %s315 = scalar_lea.hbm %s3, %s314
          %s317 = sshll.u32 %s307, 4
          %s318 = int_to_ptr.vmem [resolvable:$true] %s317
          %320 = dma.vmem_to_hbm [thread:$0]  %s318, 128, %s315, %s304
        $region40: #{tpu_custom_call.1} parent=31 // pred_fallthru
          _
      $region32: #{tpu_custom_call.1} parent=5 // pred_fallthru
        _
      %p321 = scmp.le.s32.totalorder 2, %s13
      // Predicated region
      $region41: #{tpu_custom_call.1} parent=5 // pred_check
        %p322 = pneg %p321
      $region42: #{tpu_custom_call.1} parent=5 // pred_check_branch
        %324 = sbr.rel (%p322) target = $region44
      $region43: #{tpu_custom_call.1} parent=5 // pred_region
        %s325 = ssub.s32 %s13, 2
        // Predicated region
        $region45: #{tpu_custom_call.1} parent=43 // pred_check
          %p326 = pneg %p115
        $region46: #{tpu_custom_call.1} parent=43 // pred_check_branch
          %328 = sbr.rel (%p326) target = $region48
        $region47: #{tpu_custom_call.1} parent=43 // pred_region
          %s329 = sand.u32 %s100, 1
          %s330 = scalar_lea.sflag [#allocation4], %s329
          %s331 = sand.u32 %s100, 1
          %s332 = smul.addr %s331, 8
          %s333 = scalar_lea.vmem [#allocation5], %s332
          %334 = dma.done %s330, 128
        $region48: #{tpu_custom_call.1} parent=43 // pred_fallthru
          _
      $region44: #{tpu_custom_call.1} parent=5 // pred_fallthru
        _
    $region6: #{tpu_custom_call.1} parent=1 // loop_footer
      %s17 = sadd.s32 1, %s13
    $region7: #{tpu_custom_call.1} parent=1 // loop_footer_branch
      %12 = sbr.rel target = $region3
    $region8: #{tpu_custom_call.1} parent=1 // loop_exit
      _
    %335 = vsyncpa [#allocation3], 1
    %s336 = scalar_lea.sflag [#allocation3], 1
    %337 = vsyncpa %s336, 1
    %338 = vsyncpa [#allocation4], 1
    %s339 = scalar_lea.sflag [#allocation4], 1
    %340 = vsyncpa %s339, 1

</llo_original>
